<compile_context>
chip_gen: v5e
topology: v5e:2x2
jax: 0.10.0
libtpu: 0.0.40
codegen_flags: <defaults>
</compile_context>

<pallas_src>
import numpy as np

import jax
import jax.numpy as jnp
from jax import lax
from jax.experimental import pallas as pl
from jax.experimental.pallas import tpu as pltpu


NF = 50  # 5 first-level + 9 conv3x3 taps * 5 second-level rectangle features


# --------------------------------------------------------------------------
# Pallas kernel: one batch-block GEMM against the fully folded weights.
# --------------------------------------------------------------------------
def _gemm_kernel(x_ref, w_ref, o_ref):
    o_ref[...] = jnp.dot(x_ref[...], w_ref[...],
                         preferred_element_type=jnp.float32)


def multi_scale_pallas(x_nchw, wtot, ctot, *, max_block=256,
                       vmem_budget_bytes=24 * 1024 * 1024):
    """Fused multi_scale forward: (N,Cin,H,W) -> (N, 2*out_ch+4*middle_ch, 1, 1).

    `wtot` is the host-folded (Cin*H*W, Cpad) weight from
    pack_multi_scale_weights (Cpad = Ctot rounded up to 128 lanes).
    """
    N, Cin, H, W = x_nchw.shape
    K, Cpad = wtot.shape
    assert K == Cin * H * W and H >= 3 and W >= 3

    # NCHW -> (N, Cin*H*W) is a free view: no transpose, no extra HBM pass.
    x = x_nchw.astype(wtot.dtype).reshape(N, K)

    # Batch block: multiple of 8 (sublanes), divides the padded batch, and
    # keeps 2*(x block) + weights + 2*(out block) inside the VMEM budget.
    itemsize = jnp.dtype(wtot.dtype).itemsize
    per_row = 2 * (K * itemsize + Cpad * 4)
    fixed = 2 * K * Cpad * itemsize
    nb_cap = (vmem_budget_bytes - fixed) // per_row if vmem_budget_bytes > fixed else 8
    nb_cap = max(8, (int(nb_cap) // 8) * 8)
    # TODO(synk): for very large Cin*H*W the weight alone exceeds VMEM; that
    # regime needs a K-tiled accumulator grid (not this one).

    N8 = ((N + 7) // 8) * 8                    # pad batch only to the next 8
    NB = max(8, (min(max_block, nb_cap, N8) // 8) * 8)
    while N8 % NB:                             # make NB divide the padded batch
        NB -= 8
    # Give v7x's two TensorCores at least 2 "parallel" grid steps when possible.
    if N8 // NB < 2 and N8 >= 16 and (N8 // 2) % 8 == 0:
        NB = N8 // 2

    if N8 != N:
        x = jnp.pad(x, ((0, N8 - N), (0, 0)))  # at most 7 zero rows

    out = pl.pallas_call(
        _gemm_kernel,
        out_shape=jax.ShapeDtypeStruct((N8, Cpad), jnp.float32),
        grid=(N8 // NB,),
        in_specs=[
            pl.BlockSpec((NB, K), lambda n: (n, 0)),     # lane-dense x block
            pl.BlockSpec((K, Cpad), lambda n: (0, 0)),   # resident weights
        ],
        out_specs=pl.BlockSpec((NB, Cpad), lambda n: (n, 0)),
        compiler_params=pltpu.CompilerParams(
            dimension_semantics=("parallel",),
            vmem_limit_bytes=32 * 1024 * 1024),
    )(x, wtot)

    return out[:N, :ctot].reshape(N, ctot, 1, 1)


# --------------------------------------------------------------------------
# Host-side DO-Conv weights and the full weight fold
# --------------------------------------------------------------------------
def _do_conv_weight(key, out_c, in_c, kh, kw):
    # DO-Conv fold: effective weight DoW[o,i,:,:] = sum_s W[o,i,s] * D[i,s,:]
    # (DOConv2d's forward == conv2d with DoW); D init = identity + noise.
    d_mul = kh * kw
    k_w, k_d = jax.random.split(key)
    Wp = 0.1 * jax.random.normal(k_w, (out_c, in_c, d_mul), jnp.float32)
    if d_mul > 1:
        d_diag = jnp.tile(jnp.eye(d_mul, dtype=jnp.float32)[None], (in_c, 1, 1))
        Dp = d_diag + 0.05 * jax.random.normal(k_d, (in_c, d_mul, d_mul),
                                               jnp.float32)
        dow = jnp.einsum('ois,isk->oik', Wp, Dp).reshape(out_c, in_c, kh, kw)
    else:
        dow = Wp.reshape(out_c, in_c, kh, kw)
    return dow


def init_do_weights(key, in_channel, out_channel, middle_channel):
    # TODO(synk): DOConv2d_multi's exact over-parameterization is not given in
    # the spec; modeled with the standard DO-Conv fold (same forward as a
    # plain conv2d with the composite weight).
    ks = jax.random.split(key, 7)
    return (
        _do_conv_weight(ks[0], out_channel, in_channel, 1, 1),      # conv1x1
        _do_conv_weight(ks[1], middle_channel, out_channel, 1, 3),  # conv1x3
        _do_conv_weight(ks[2], middle_channel, out_channel, 3, 1),  # conv3x1
        _do_conv_weight(ks[3], out_channel, out_channel, 3, 3),     # conv3x3
        _do_conv_weight(ks[4], middle_channel, out_channel, 1, 3),  # conv3_1x3
        _do_conv_weight(ks[5], middle_channel, out_channel, 3, 1),  # conv3_3x1
        _do_conv_weight(ks[6], out_channel, out_channel, 1, 1),     # pool_conv
    )


def _pack_feature_weights(dows, H, W):
    """(NF, Cin, Ctot) fold of all conv weights + 1x1 + pooling denominators.

    Feature j of an image is the per-channel sum of x over a fixed rectangle /
    border row / border column (see _selection_masks); multi_scale's forward
    is linear in those NF features.
    """
    dow1, dow13, dow31, dow33, dow313, dow331, dowpc = [
        np.asarray(a, np.float64) for a in dows]
    Co, Cin = dow1.shape[0], dow1.shape[1]
    M = dow13.shape[0]
    HW = float(H * W)
    N3 = float((H - 2) * (W - 2))
    Ctot = 2 * Co + 4 * M

    w1 = dow1[:, :, 0, 0].T                               # (Cin, Co)
    w13 = [dow13[:, :, 0, k].T for k in range(3)]         # (Co, M) per tap
    w31 = [dow31[:, :, k, 0].T for k in range(3)]
    w313 = [dow313[:, :, 0, k].T for k in range(3)]
    w331 = [dow331[:, :, k, 0].T for k in range(3)]
    wpc = dowpc[:, :, 0, 0].T                             # (Co, Co)

    # fold the 1x1 conv into everything that consumes X_1
    w13f = [w1 @ m for m in w13]                          # (Cin, M)
    w31f = [w1 @ m for m in w31]
    w33f = [w1 @ dow33[:, :, ky, kx].T                    # (Cin, Co), t=3*ky+kx
            for ky in range(3) for kx in range(3)]
    wpcf = w1 @ wpc                                       # (Cin, Co)

    s313 = w313[0] + w313[1] + w313[2]                    # (Co, M)
    s331 = w331[0] + w331[1] + w331[2]

    Wb = np.zeros((NF, Cin, Ctot), np.float64)
    cX1, cX21, cX22 = 0, Co, Co + M
    cX311, cX312, cX4 = Co + 2 * M, Co + 3 * M, Co + 4 * M

    # ---- first level (pooled over H*W) -----------------------------------
    Wb[0, :, cX1:cX1 + Co] = w1 / HW                      # X_1_out
    Wb[0, :, cX21:cX21 + M] = (w13f[0] + w13f[1] + w13f[2]) / HW
    Wb[0, :, cX22:cX22 + M] = (w31f[0] + w31f[1] + w31f[2]) / HW
    Wb[0, :, cX4:cX4 + Co] = wpcf / HW                    # X_4_out
    Wb[1, :, cX21:cX21 + M] = -w13f[2] / HW               # column 0 kills d=+1
    Wb[2, :, cX21:cX21 + M] = -w13f[0] / HW               # column W-1 kills d=-1
    Wb[3, :, cX22:cX22 + M] = -w31f[2] / HW               # row 0
    Wb[4, :, cX22:cX22 + M] = -w31f[0] / HW               # row H-1

    # ---- second level (pooled over (H-2)*(W-2)) ---------------------------
    for t in range(9):
        b = 5 + 5 * t
        Wb[b + 0, :, cX311:cX311 + M] = (w33f[t] @ s313) / N3
        Wb[b + 0, :, cX312:cX312 + M] = (w33f[t] @ s331) / N3
        Wb[b + 1, :, cX311:cX311 + M] = -(w33f[t] @ w313[2]) / N3  # first col
        Wb[b + 2, :, cX311:cX311 + M] = -(w33f[t] @ w313[0]) / N3  # last col
        Wb[b + 3, :, cX312:cX312 + M] = -(w33f[t] @ w331[2]) / N3  # first row
        Wb[b + 4, :, cX312:cX312 + M] = -(w33f[t] @ w331[0]) / N3  # last row

    return Wb, Ctot


def _selection_masks(H, W):
    """(NF, H, W) 0/1 masks: feature j = per-channel sum of x over mask j."""
    S = np.zeros((NF, H, W), np.float64)
    S[0] = 1.0                      # total sum
    S[1, :, 0] = 1.0                # column 0
    S[2, :, W - 1] = 1.0            # column W-1
    S[3, 0, :] = 1.0                # row 0
    S[4, H - 1, :] = 1.0            # row H-1
    j = 5
    for ky in range(3):             # conv3x3 tap (ky, kx): valid region shifts
        for kx in range(3):
            rows = slice(ky, ky + H - 2)
            cols = slice(kx, kx + W - 2)
            S[j, rows, cols] = 1.0; j += 1           # shifted rectangle sum
            S[j, rows, kx] = 1.0; j += 1             # first valid column
            S[j, rows, kx + W - 3] = 1.0; j += 1     # last valid column
            S[j, ky, cols] = 1.0; j += 1             # first valid row
            S[j, ky + H - 3, cols] = 1.0; j += 1     # last valid row
    assert j == NF
    return S


def pack_multi_scale_weights(dows, H, W, *, dtype=jnp.float32, lane=128):
    """Full fold: one (Cin*H*W, Cpad) matrix so the kernel is a single GEMM.

    Composes the rectangle-selection masks into the feature-level fold (f64),
    then zero-pads the output channels to a multiple of 128 lanes so stores
    are unmasked and full-lane.  Returns (Wtotal, Ctot).  H, W and both
    pooling denominators are baked in: re-pack for every spatial size.
    Pass dtype=jnp.bfloat16 to halve the dominant HBM read of x on v6e/v7x
    (MXU still accumulates in f32); f32 keeps the strict reference tolerance.
    """
    Wb, Ctot = _pack_feature_weights(dows, H, W)          # (NF, Cin, Ctot)
    S = _selection_masks(H, W)                            # (NF, H, W)
    Cin = Wb.shape[1]
    Wtot = np.einsum('jhw,jco->chwo', S, Wb).reshape(Cin * H * W, Ctot)
    Cpad = ((Ctot + lane - 1) // lane) * lane
    if Cpad != Ctot:
        Wtot = np.concatenate(
            [Wtot, np.zeros((Wtot.shape[0], Cpad - Ctot), Wtot.dtype)], axis=1)
    return jnp.asarray(Wtot.astype(np.float32)).astype(dtype), Ctot


# --------------------------------------------------------------------------
# Pure-JAX reference (direct translation of the PyTorch forward)
# --------------------------------------------------------------------------
def reference_forward(x_nchw, dows):
    dow1, dow13, dow31, dow33, dow313, dow331, dowpc = dows
    dn = ('NCHW', 'OIHW', 'NCHW')

    def conv(a, w, pad):
        return lax.conv_general_dilated(a, w, (1, 1), pad,
                                        dimension_numbers=dn,
                                        precision=lax.Precision.HIGHEST)

    def pool(a):
        return jnp.mean(a, axis=(2, 3), keepdims=True)

    x1 = conv(x_nchw, dow1, [(0, 0), (0, 0)])
    x21 = conv(x1, dow13, [(0, 0), (1, 1)])
    x22 = conv(x1, dow31, [(1, 1), (0, 0)])
    x31 = conv(x1, dow33, [(0, 0), (0, 0)])
    x311 = conv(x31, dow313, [(0, 0), (1, 1)])
    x312 = conv(x31, dow331, [(1, 1), (0, 0)])
    x4 = conv(x1, dowpc, [(0, 0), (0, 0)])
    return jnp.concatenate([pool(x1), pool(x21), pool(x22),
                            pool(x311), pool(x312), pool(x4)], axis=1)


if __name__ == "__main__":
    key = jax.random.PRNGKey(0)
    k_x, k_p = jax.random.split(key)

    in_channel, out_channel, middle_channel = 4, 8, 4
    N, H, W = 2, 16, 16

    x = jax.random.normal(k_x, (N, in_channel, H, W), jnp.float32)  # NCHW
    dows = init_do_weights(k_p, in_channel, out_channel, middle_channel)

    wtot, ctot = pack_multi_scale_weights(dows, H, W)   # folded once, host-side
    out = multi_scale_pallas(x, wtot, ctot)             # (N, 2*out+4*middle, 1, 1)
    jax.block_until_ready(out)

    ref = reference_forward(x, dows)
    np.testing.assert_allclose(np.asarray(out), np.asarray(ref),
                               rtol=2e-3, atol=1e-4)
    print("KERNEL_OK")
</pallas_src>

<mosaic_0001>
module attributes {stable_mosaic.version = 11 : i64} {
  func.func @_gemm_kernel(%arg0: i32, %arg1: memref<8x1024xf32, #tpu.memory_space<vmem>>, %arg2: memref<1024x128xf32, #tpu.memory_space<vmem>>, %arg3: memref<8x128xf32, #tpu.memory_space<vmem>>) attributes {dimension_semantics = [#tpu.dimension_semantics<parallel>], iteration_bounds = array<i64: 1>, scalar_prefetch = 0 : i64, scratch_operands = 0 : i64, tpu.core_type = #tpu.core_type<tc>, window_params = [{transform_indices = @transform_0, window_bounds = array<i64: 8, 1024>}, {pipeline_mode = #tpu.pipeline_mode<synchronous>, transform_indices = @transform_1, window_bounds = array<i64: 1024, 128>}, {transform_indices = @transform_2, window_bounds = array<i64: 8, 128>}]} {
    %c0 = arith.constant 0 : index
    %c0_0 = arith.constant 0 : index
    %0 = vector.load %arg1[%c0, %c0_0] : memref<8x1024xf32, #tpu.memory_space<vmem>>, vector<8x1024xf32>
    %c0_1 = arith.constant 0 : index
    %c0_2 = arith.constant 0 : index
    %1 = vector.load %arg2[%c0_1, %c0_2] : memref<1024x128xf32, #tpu.memory_space<vmem>>, vector<1024x128xf32>
    %cst = arith.constant dense<0.000000e+00> : vector<8x128xf32>
    %2 = tpu.matmul %0, %1, %cst {dimension_numbers = #tpu.dot_dimension_numbers<[1], [0], [0], [1], [0, 0, 1, 1], [], []>} : vector<8x1024xf32>, vector<1024x128xf32>, vector<8x128xf32> -> vector<8x128xf32>
    %c0_3 = arith.constant 0 : index
    %c0_4 = arith.constant 0 : index
    %3 = vector.load %arg3[%c0_3, %c0_4] : memref<8x128xf32, #tpu.memory_space<vmem>>, vector<8x128xf32>
    tpu.vector_store %arg3[%c0_3, %c0_4], %2 {strides = array<i32>} : memref<8x128xf32, #tpu.memory_space<vmem>>, vector<8x128xf32>,
    return
  }
  func.func @transform_0(%arg0: i32) -> (i32, i32) {
    %c0_i32 = arith.constant 0 : i32
    %c0_i32_0 = arith.constant 0 : i32
    return %arg0, %c0_i32 : i32, i32
  }
  func.func @transform_1(%arg0: i32) -> (i32, i32) {
    %c0_i32 = arith.constant 0 : i32
    %c0_i32_0 = arith.constant 0 : i32
    %c0_i32_1 = arith.constant 0 : i32
    return %c0_i32, %c0_i32_0 : i32, i32
  }
  func.func @transform_2(%arg0: i32) -> (i32, i32) {
    %c0_i32 = arith.constant 0 : i32
    %c0_i32_0 = arith.constant 0 : i32
    return %arg0, %c0_i32 : i32, i32
  }
}

</mosaic_0001>

<llo_original>
// kernel: tpu_custom_call.1
$region0: #{tpu_custom_call.1}
  #allocation0 [shape = 'u32[]', space=smem, size = 0x4, offset = 0x4, fixed_abs, tag = 'smem constant byte address 0x4 - core index']
  #allocation1 [shape = 'u32[72,128]{1,0:T(1,128)}', space=vmem, size = 0x9000, scoped, tag = 'internal scratch']
  %s0 = inlined_call_operand.hbm [shape: f32[8,1024], index: 0, kind: input, shape index: {}]
  %s1 = inlined_call_operand.hbm [shape: f32[1024,128], index: 1, kind: input, shape index: {}]
  %s2 = inlined_call_operand.hbm [shape: f32[8,128], index: 2, kind: output, shape index: {}]
  %s3 = sld [smem:[#allocation0]]
  $region26: #{tpu_custom_call.1} parent=0
    _
  %s5 = ssub.s32 1, %s3
  %s6 = scalar_select 0, %s5, %s3
  $region1: #{tpu_custom_call.1} parent=0
    #allocation2 [shape = 'u8[32768]{0}', space=vmem, size = 0x8000, scoped, tag = 'input window, operand 0, single buffered']
    #allocation3 [shape = 's32[1]{0}', space=sflag, size = 0x4, scoped, tag = 'scoped memory for tpu_custom_call.1']
    #allocation4 [shape = 's32[1]{0}', space=sflag, size = 0x4, scoped, tag = 'scoped memory for tpu_custom_call.1']
    #allocation5 [shape = 'u8[524288]{0}', space=vmem, size = 0x80000, scoped, tag = 'input window, operand 1, single buffered']
    #allocation6 [shape = 's32[1]{0}', space=sflag, size = 0x4, scoped, tag = 'scoped memory for tpu_custom_call.1']
    #allocation7 [shape = 'u8[4096]{0}', space=vmem, size = 0x1000, scoped, tag = 'output window, operand 0, single buffered']
    %7 = vsyncpa [#allocation3], 0
    %8 = vsyncpa [#allocation6], 0
    %9 = vsyncpa [#allocation4], 0
    // Predicated region
    $region2: #{tpu_custom_call.1} parent=1 // pred_check
      _
    $region3: #{tpu_custom_call.1} parent=1 // pred_check_branch
      %11 = sbr.rel (0) target = $region5
    $region4: #{tpu_custom_call.1} parent=1 // pred_region
      %13 = vsyncadd [#allocation3], 0
      %s15 = sshll.u32 %s0, 4
      %s16 = int_to_ptr.hbm [resolvable:$true] %s15
      %s17 = sshll.u32 [#allocation2], 4
      %s18 = int_to_ptr.vmem [resolvable:$true] %s17
      %20 = dma.hbm_to_vmem [thread:$0]  %s16, 1024, %s18, [#allocation3]
    $region5: #{tpu_custom_call.1} parent=1 // pred_fallthru
      _
    // Predicated region
    $region6: #{tpu_custom_call.1} parent=1 // pred_check
      _
    $region7: #{tpu_custom_call.1} parent=1 // pred_check_branch
      %22 = sbr.rel (0) target = $region9
    $region8: #{tpu_custom_call.1} parent=1 // pred_region
      %24 = vsyncadd [#allocation6], 0
      %s25 = sshll.u32 %s1, 4
      %s26 = int_to_ptr.hbm [resolvable:$true] %s25
      %s27 = sshll.u32 [#allocation5], 4
      %s28 = int_to_ptr.vmem [resolvable:$true] %s27
      %33 = dma.hbm_to_vmem [thread:$0]  %s26, 16384, %s28, [#allocation6], 128, 128, 8
    $region9: #{tpu_custom_call.1} parent=1 // pred_fallthru
      _
    // Predicated region
    $region10: #{tpu_custom_call.1} parent=1 // pred_check
      _
    $region11: #{tpu_custom_call.1} parent=1 // pred_check_branch
      %35 = sbr.rel (0) target = $region13
    $region12: #{tpu_custom_call.1} parent=1 // pred_region
      %37 = dma.done [#allocation3], 1024
    $region13: #{tpu_custom_call.1} parent=1 // pred_fallthru
      _
    // Predicated region
    $region14: #{tpu_custom_call.1} parent=1 // pred_check
      _
    $region15: #{tpu_custom_call.1} parent=1 // pred_check_branch
      %39 = sbr.rel (0) target = $region17
    $region16: #{tpu_custom_call.1} parent=1 // pred_region
      %41 = dma.done [#allocation6], 16384
    $region17: #{tpu_custom_call.1} parent=1 // pred_fallthru
      _
    %v42 = vld [vmem:[#allocation2] sm:$0xff]
    %v43 = vld [vmem:[#allocation2 + $0x8] sm:$0xff]
    %v44 = vld [vmem:[#allocation2 + $0x10] sm:$0xff]
    %v45 = vld [vmem:[#allocation2 + $0x18] sm:$0xff]
    %v46 = vld [vmem:[#allocation2 + $0x20] sm:$0xff]
    %v47 = vld [vmem:[#allocation2 + $0x28] sm:$0xff]
    %v48 = vld [vmem:[#allocation2 + $0x30] sm:$0xff]
    %v49 = vld [vmem:[#allocation2 + $0x38] sm:$0xff]
    %v50 = vld [vmem:[#allocation5] sm:$0xff]
    %v51 = vld [vmem:[#allocation5 + $0x8] sm:$0xff]
    %v52 = vld [vmem:[#allocation5 + $0x10] sm:$0xff]
    %v53 = vld [vmem:[#allocation5 + $0x18] sm:$0xff]
    %v54 = vld [vmem:[#allocation5 + $0x20] sm:$0xff]
    %v55 = vld [vmem:[#allocation5 + $0x28] sm:$0xff]
    %v56 = vld [vmem:[#allocation5 + $0x30] sm:$0xff]
    %v57 = vld [vmem:[#allocation5 + $0x38] sm:$0xff]
    %v58 = vld [vmem:[#allocation5 + $0x40] sm:$0xff]
    %v59 = vld [vmem:[#allocation5 + $0x48] sm:$0xff]
    %v60 = vld [vmem:[#allocation5 + $0x50] sm:$0xff]
    %v61 = vld [vmem:[#allocation5 + $0x58] sm:$0xff]
    %v62 = vld [vmem:[#allocation5 + $0x60] sm:$0xff]
    %v63 = vld [vmem:[#allocation5 + $0x68] sm:$0xff]
    %v64 = vld [vmem:[#allocation5 + $0x70] sm:$0xff]
    %v65 = vld [vmem:[#allocation5 + $0x78] sm:$0xff]
    %v66 = vld [vmem:[#allocation5 + $0x80] sm:$0xff]
    %v67 = vld [vmem:[#allocation5 + $0x88] sm:$0xff]
    %v68 = vld [vmem:[#allocation5 + $0x90] sm:$0xff]
    %v69 = vld [vmem:[#allocation5 + $0x98] sm:$0xff]
    %v70 = vld [vmem:[#allocation5 + $0xa0] sm:$0xff]
    %v71 = vld [vmem:[#allocation5 + $0xa8] sm:$0xff]
    %v72 = vld [vmem:[#allocation5 + $0xb0] sm:$0xff]
    %v73 = vld [vmem:[#allocation5 + $0xb8] sm:$0xff]
    %v74 = vld [vmem:[#allocation5 + $0xc0] sm:$0xff]
    %v75 = vld [vmem:[#allocation5 + $0xc8] sm:$0xff]
    %v76 = vld [vmem:[#allocation5 + $0xd0] sm:$0xff]
    %v77 = vld [vmem:[#allocation5 + $0xd8] sm:$0xff]
    %v78 = vld [vmem:[#allocation5 + $0xe0] sm:$0xff]
    %v79 = vld [vmem:[#allocation5 + $0xe8] sm:$0xff]
    %v80 = vld [vmem:[#allocation5 + $0xf0] sm:$0xff]
    %v81 = vld [vmem:[#allocation5 + $0xf8] sm:$0xff]
    %v82 = vld [vmem:[#allocation5 + $0x100] sm:$0xff]
    %v83 = vld [vmem:[#allocation5 + $0x108] sm:$0xff]
    %v84 = vld [vmem:[#allocation5 + $0x110] sm:$0xff]
    %v85 = vld [vmem:[#allocation5 + $0x118] sm:$0xff]
    %v86 = vld [vmem:[#allocation5 + $0x120] sm:$0xff]
    %v87 = vld [vmem:[#allocation5 + $0x128] sm:$0xff]
    %v88 = vld [vmem:[#allocation5 + $0x130] sm:$0xff]
    %v89 = vld [vmem:[#allocation5 + $0x138] sm:$0xff]
    %v90 = vld [vmem:[#allocation5 + $0x140] sm:$0xff]
    %v91 = vld [vmem:[#allocation5 + $0x148] sm:$0xff]
    %v92 = vld [vmem:[#allocation5 + $0x150] sm:$0xff]
    %v93 = vld [vmem:[#allocation5 + $0x158] sm:$0xff]
    %v94 = vld [vmem:[#allocation5 + $0x160] sm:$0xff]
    %v95 = vld [vmem:[#allocation5 + $0x168] sm:$0xff]
    %v96 = vld [vmem:[#allocation5 + $0x170] sm:$0xff]
    %v97 = vld [vmem:[#allocation5 + $0x178] sm:$0xff]
    %v98 = vld [vmem:[#allocation5 + $0x180] sm:$0xff]
    %v99 = vld [vmem:[#allocation5 + $0x188] sm:$0xff]
    %v100 = vld [vmem:[#allocation5 + $0x190] sm:$0xff]
    %v101 = vld [vmem:[#allocation5 + $0x198] sm:$0xff]
    %v102 = vld [vmem:[#allocation5 + $0x1a0] sm:$0xff]
    %v103 = vld [vmem:[#allocation5 + $0x1a8] sm:$0xff]
    %v104 = vld [vmem:[#allocation5 + $0x1b0] sm:$0xff]
    %v105 = vld [vmem:[#allocation5 + $0x1b8] sm:$0xff]
    %v106 = vld [vmem:[#allocation5 + $0x1c0] sm:$0xff]
    %v107 = vld [vmem:[#allocation5 + $0x1c8] sm:$0xff]
    %v108 = vld [vmem:[#allocation5 + $0x1d0] sm:$0xff]
    %v109 = vld [vmem:[#allocation5 + $0x1d8] sm:$0xff]
    %v110 = vld [vmem:[#allocation5 + $0x1e0] sm:$0xff]
    %v111 = vld [vmem:[#allocation5 + $0x1e8] sm:$0xff]
    %v112 = vld [vmem:[#allocation5 + $0x1f0] sm:$0xff]
    %v113 = vld [vmem:[#allocation5 + $0x1f8] sm:$0xff]
    %v114 = vld [vmem:[#allocation5 + $0x200] sm:$0xff]
    %v115 = vld [vmem:[#allocation5 + $0x208] sm:$0xff]
    %v116 = vld [vmem:[#allocation5 + $0x210] sm:$0xff]
    %v117 = vld [vmem:[#allocation5 + $0x218] sm:$0xff]
    %v118 = vld [vmem:[#allocation5 + $0x220] sm:$0xff]
    %v119 = vld [vmem:[#allocation5 + $0x228] sm:$0xff]
    %v120 = vld [vmem:[#allocation5 + $0x230] sm:$0xff]
    %v121 = vld [vmem:[#allocation5 + $0x238] sm:$0xff]
    %v122 = vld [vmem:[#allocation5 + $0x240] sm:$0xff]
    %v123 = vld [vmem:[#allocation5 + $0x248] sm:$0xff]
    %v124 = vld [vmem:[#allocation5 + $0x250] sm:$0xff]
    %v125 = vld [vmem:[#allocation5 + $0x258] sm:$0xff]
    %v126 = vld [vmem:[#allocation5 + $0x260] sm:$0xff]
    %v127 = vld [vmem:[#allocation5 + $0x268] sm:$0xff]
    %v128 = vld [vmem:[#allocation5 + $0x270] sm:$0xff]
    %v129 = vld [vmem:[#allocation5 + $0x278] sm:$0xff]
    %v130 = vld [vmem:[#allocation5 + $0x280] sm:$0xff]
    %v131 = vld [vmem:[#allocation5 + $0x288] sm:$0xff]
    %v132 = vld [vmem:[#allocation5 + $0x290] sm:$0xff]
    %v133 = vld [vmem:[#allocation5 + $0x298] sm:$0xff]
    %v134 = vld [vmem:[#allocation5 + $0x2a0] sm:$0xff]
    %v135 = vld [vmem:[#allocation5 + $0x2a8] sm:$0xff]
    %v136 = vld [vmem:[#allocation5 + $0x2b0] sm:$0xff]
    %v137 = vld [vmem:[#allocation5 + $0x2b8] sm:$0xff]
    %v138 = vld [vmem:[#allocation5 + $0x2c0] sm:$0xff]
    %v139 = vld [vmem:[#allocation5 + $0x2c8] sm:$0xff]
    %v140 = vld [vmem:[#allocation5 + $0x2d0] sm:$0xff]
    %v141 = vld [vmem:[#allocation5 + $0x2d8] sm:$0xff]
    %v142 = vld [vmem:[#allocation5 + $0x2e0] sm:$0xff]
    %v143 = vld [vmem:[#allocation5 + $0x2e8] sm:$0xff]
    %v144 = vld [vmem:[#allocation5 + $0x2f0] sm:$0xff]
    %v145 = vld [vmem:[#allocation5 + $0x2f8] sm:$0xff]
    %v146 = vld [vmem:[#allocation5 + $0x300] sm:$0xff]
    %v147 = vld [vmem:[#allocation5 + $0x308] sm:$0xff]
    %v148 = vld [vmem:[#allocation5 + $0x310] sm:$0xff]
    %v149 = vld [vmem:[#allocation5 + $0x318] sm:$0xff]
    %v150 = vld [vmem:[#allocation5 + $0x320] sm:$0xff]
    %v151 = vld [vmem:[#allocation5 + $0x328] sm:$0xff]
    %v152 = vld [vmem:[#allocation5 + $0x330] sm:$0xff]
    %v153 = vld [vmem:[#allocation5 + $0x338] sm:$0xff]
    %v154 = vld [vmem:[#allocation5 + $0x340] sm:$0xff]
    %v155 = vld [vmem:[#allocation5 + $0x348] sm:$0xff]
    %v156 = vld [vmem:[#allocation5 + $0x350] sm:$0xff]
    %v157 = vld [vmem:[#allocation5 + $0x358] sm:$0xff]
    %v158 = vld [vmem:[#allocation5 + $0x360] sm:$0xff]
    %v159 = vld [vmem:[#allocation5 + $0x368] sm:$0xff]
    %v160 = vld [vmem:[#allocation5 + $0x370] sm:$0xff]
    %v161 = vld [vmem:[#allocation5 + $0x378] sm:$0xff]
    %v162 = vld [vmem:[#allocation5 + $0x380] sm:$0xff]
    %v163 = vld [vmem:[#allocation5 + $0x388] sm:$0xff]
    %v164 = vld [vmem:[#allocation5 + $0x390] sm:$0xff]
    %v165 = vld [vmem:[#allocation5 + $0x398] sm:$0xff]
    %v166 = vld [vmem:[#allocation5 + $0x3a0] sm:$0xff]
    %v167 = vld [vmem:[#allocation5 + $0x3a8] sm:$0xff]
    %v168 = vld [vmem:[#allocation5 + $0x3b0] sm:$0xff]
    %v169 = vld [vmem:[#allocation5 + $0x3b8] sm:$0xff]
    %v170 = vld [vmem:[#allocation5 + $0x3c0] sm:$0xff]
    %v171 = vld [vmem:[#allocation5 + $0x3c8] sm:$0xff]
    %v172 = vld [vmem:[#allocation5 + $0x3d0] sm:$0xff]
    %v173 = vld [vmem:[#allocation5 + $0x3d8] sm:$0xff]
    %v174 = vld [vmem:[#allocation5 + $0x3e0] sm:$0xff]
    %v175 = vld [vmem:[#allocation5 + $0x3e8] sm:$0xff]
    %v176 = vld [vmem:[#allocation5 + $0x3f0] sm:$0xff]
    %v177 = vld [vmem:[#allocation5 + $0x3f8] sm:$0xff]
    %178 = vmatpush.msra.mxu0 %v65
    %179 = vmatpush.msra.mxu0 %v64
    %180 = vmatpush.msra.mxu0 %v63
    %181 = vmatpush.msra.mxu0 %v62
    %182 = vmatpush.msra.mxu0 %v61
    %183 = vmatpush.msra.mxu0 %v60
    %184 = vmatpush.msra.mxu0 %v59
    %185 = vmatpush.msra.mxu0 %v58
    %186 = vmatpush.msra.mxu0 %v57
    %187 = vmatpush.msra.mxu0 %v56
    %188 = vmatpush.msra.mxu0 %v55
    %189 = vmatpush.msra.mxu0 %v54
    %190 = vmatpush.msra.mxu0 %v53
    %191 = vmatpush.msra.mxu0 %v52
    %192 = vmatpush.msra.mxu0 %v51
    %193 = vmatpush.msra.mxu0 %v50
    %194 = vmatmul.f32.gmra.mxu0 %v42
    %v195 = vpop.f32.mrf.mxu0
    %v196 = vadd.f32 0.0, %v195
    %197 = vdwg.mxu0
    %198 = vmatpush.msra.mxu0 %v81
    %199 = vmatpush.msra.mxu0 %v80
    %200 = vmatpush.msra.mxu0 %v79
    %201 = vmatpush.msra.mxu0 %v78
    %202 = vmatpush.msra.mxu0 %v77
    %203 = vmatpush.msra.mxu0 %v76
    %204 = vmatpush.msra.mxu0 %v75
    %205 = vmatpush.msra.mxu0 %v74
    %206 = vmatpush.msra.mxu0 %v73
    %207 = vmatpush.msra.mxu0 %v72
    %208 = vmatpush.msra.mxu0 %v71
    %209 = vmatpush.msra.mxu0 %v70
    %210 = vmatpush.msra.mxu0 %v69
    %211 = vmatpush.msra.mxu0 %v68
    %212 = vmatpush.msra.mxu0 %v67
    %213 = vmatpush.msra.mxu0 %v66
    %214 = vmatmul.f32.gmra.mxu0 %v43
    %v215 = vpop.f32.mrf.mxu0
    %v216 = vadd.f32 %v196, %v215
    %217 = vdwg.mxu0
    %218 = vmatpush.msra.mxu0 %v97
    %219 = vmatpush.msra.mxu0 %v96
    %220 = vmatpush.msra.mxu0 %v95
    %221 = vmatpush.msra.mxu0 %v94
    %222 = vmatpush.msra.mxu0 %v93
    %223 = vmatpush.msra.mxu0 %v92
    %224 = vmatpush.msra.mxu0 %v91
    %225 = vmatpush.msra.mxu0 %v90
    %226 = vmatpush.msra.mxu0 %v89
    %227 = vmatpush.msra.mxu0 %v88
    %228 = vmatpush.msra.mxu0 %v87
    %229 = vmatpush.msra.mxu0 %v86
    %230 = vmatpush.msra.mxu0 %v85
    %231 = vmatpush.msra.mxu0 %v84
    %232 = vmatpush.msra.mxu0 %v83
    %233 = vmatpush.msra.mxu0 %v82
    %234 = vmatmul.f32.gmra.mxu0 %v44
    %v235 = vpop.f32.mrf.mxu0
    %v236 = vadd.f32 %v216, %v235
    %237 = vdwg.mxu0
    %238 = vmatpush.msra.mxu0 %v113
    %239 = vmatpush.msra.mxu0 %v112
    %240 = vmatpush.msra.mxu0 %v111
    %241 = vmatpush.msra.mxu0 %v110
    %242 = vmatpush.msra.mxu0 %v109
    %243 = vmatpush.msra.mxu0 %v108
    %244 = vmatpush.msra.mxu0 %v107
    %245 = vmatpush.msra.mxu0 %v106
    %246 = vmatpush.msra.mxu0 %v105
    %247 = vmatpush.msra.mxu0 %v104
    %248 = vmatpush.msra.mxu0 %v103
    %249 = vmatpush.msra.mxu0 %v102
    %250 = vmatpush.msra.mxu0 %v101
    %251 = vmatpush.msra.mxu0 %v100
    %252 = vmatpush.msra.mxu0 %v99
    %253 = vmatpush.msra.mxu0 %v98
    %254 = vmatmul.f32.gmra.mxu0 %v45
    %v255 = vpop.f32.mrf.mxu0
    %v256 = vadd.f32 %v236, %v255
    %257 = vdwg.mxu0
    %258 = vmatpush.msra.mxu0 %v129
    %259 = vmatpush.msra.mxu0 %v128
    %260 = vmatpush.msra.mxu0 %v127
    %261 = vmatpush.msra.mxu0 %v126
    %262 = vmatpush.msra.mxu0 %v125
    %263 = vmatpush.msra.mxu0 %v124
    %264 = vmatpush.msra.mxu0 %v123
    %265 = vmatpush.msra.mxu0 %v122
    %266 = vmatpush.msra.mxu0 %v121
    %267 = vmatpush.msra.mxu0 %v120
    %268 = vmatpush.msra.mxu0 %v119
    %269 = vmatpush.msra.mxu0 %v118
    %270 = vmatpush.msra.mxu0 %v117
    %271 = vmatpush.msra.mxu0 %v116
    %272 = vmatpush.msra.mxu0 %v115
    %273 = vmatpush.msra.mxu0 %v114
    %274 = vmatmul.f32.gmra.mxu0 %v46
    %v275 = vpop.f32.mrf.mxu0
    %v276 = vadd.f32 %v256, %v275
    %277 = vdwg.mxu0
    %278 = vmatpush.msra.mxu0 %v145
    %279 = vmatpush.msra.mxu0 %v144
    %280 = vmatpush.msra.mxu0 %v143
    %281 = vmatpush.msra.mxu0 %v142
    %282 = vmatpush.msra.mxu0 %v141
    %283 = vmatpush.msra.mxu0 %v140
    %284 = vmatpush.msra.mxu0 %v139
    %285 = vmatpush.msra.mxu0 %v138
    %286 = vmatpush.msra.mxu0 %v137
    %287 = vmatpush.msra.mxu0 %v136
    %288 = vmatpush.msra.mxu0 %v135
    %289 = vmatpush.msra.mxu0 %v134
    %290 = vmatpush.msra.mxu0 %v133
    %291 = vmatpush.msra.mxu0 %v132
    %292 = vmatpush.msra.mxu0 %v131
    %293 = vmatpush.msra.mxu0 %v130
    %294 = vmatmul.f32.gmra.mxu0 %v47
    %v295 = vpop.f32.mrf.mxu0
    %v296 = vadd.f32 %v276, %v295
    %297 = vdwg.mxu0
    %298 = vmatpush.msra.mxu0 %v161
    %299 = vmatpush.msra.mxu0 %v160
    %300 = vmatpush.msra.mxu0 %v159
    %301 = vmatpush.msra.mxu0 %v158
    %302 = vmatpush.msra.mxu0 %v157
    %303 = vmatpush.msra.mxu0 %v156
    %304 = vmatpush.msra.mxu0 %v155
    %305 = vmatpush.msra.mxu0 %v154
    %306 = vmatpush.msra.mxu0 %v153
    %307 = vmatpush.msra.mxu0 %v152
    %308 = vmatpush.msra.mxu0 %v151
    %309 = vmatpush.msra.mxu0 %v150
    %310 = vmatpush.msra.mxu0 %v149
    %311 = vmatpush.msra.mxu0 %v148
    %312 = vmatpush.msra.mxu0 %v147
    %313 = vmatpush.msra.mxu0 %v146
    %314 = vmatmul.f32.gmra.mxu0 %v48
    %v315 = vpop.f32.mrf.mxu0
    %v316 = vadd.f32 %v296, %v315
    %317 = vdwg.mxu0
    %318 = vmatpush.msra.mxu0 %v177
    %319 = vmatpush.msra.mxu0 %v176
    %320 = vmatpush.msra.mxu0 %v175
    %321 = vmatpush.msra.mxu0 %v174
    %322 = vmatpush.msra.mxu0 %v173
    %323 = vmatpush.msra.mxu0 %v172
    %324 = vmatpush.msra.mxu0 %v171
    %325 = vmatpush.msra.mxu0 %v170
    %326 = vmatpush.msra.mxu0 %v169
    %327 = vmatpush.msra.mxu0 %v168
    %328 = vmatpush.msra.mxu0 %v167
    %329 = vmatpush.msra.mxu0 %v166
    %330 = vmatpush.msra.mxu0 %v165
    %331 = vmatpush.msra.mxu0 %v164
    %332 = vmatpush.msra.mxu0 %v163
    %333 = vmatpush.msra.mxu0 %v162
    %334 = vmatmul.f32.gmra.mxu0 %v49
    %v335 = vpop.f32.mrf.mxu0
    %v336 = vadd.f32 %v316, %v335
    %337 = vdwg.mxu0
    %338 = vst [vmem:[#allocation7] sm:$0xff] %v336
    // Predicated region
    $region18: #{tpu_custom_call.1} parent=1 // pred_check
      _
    $region19: #{tpu_custom_call.1} parent=1 // pred_check_branch
      %340 = sbr.rel (0) target = $region21
    $region20: #{tpu_custom_call.1} parent=1 // pred_region
      %342 = vsyncadd [#allocation4], 0
      %s344 = sshll.u32 [#allocation7], 4
      %s345 = int_to_ptr.vmem [resolvable:$true] %s344
      %s346 = sshll.u32 %s2, 4
      %s347 = int_to_ptr.hbm [resolvable:$true] %s346
      %349 = dma.vmem_to_hbm [thread:$0]  %s345, 128, %s347, [#allocation4]
    $region21: #{tpu_custom_call.1} parent=1 // pred_fallthru
      _
    // Predicated region
    $region22: #{tpu_custom_call.1} parent=1 // pred_check
      _
    $region23: #{tpu_custom_call.1} parent=1 // pred_check_branch
      %351 = sbr.rel (0) target = $region25
    $region24: #{tpu_custom_call.1} parent=1 // pred_region
      %353 = dma.done [#allocation4], 128
    $region25: #{tpu_custom_call.1} parent=1 // pred_fallthru
      _
    %354 = vsyncpa [#allocation3], 1
    %355 = vsyncpa [#allocation6], 1
    %356 = vsyncpa [#allocation4], 1

</llo_original>
